<compile_context>
chip_gen: v6e
topology: v6e:2x2x1
jax: 0.10.0
libtpu: 0.0.40
codegen_flags: <defaults>
</compile_context>

<pallas_src>
import jax
import jax.numpy as jnp
import numpy as np
from jax import lax
from jax.experimental import pallas as pl
from jax.experimental.pallas import tpu as pltpu

HIGHEST = jax.lax.Precision.HIGHEST
_VMEM_LIMIT = 48 * 1024 * 1024


# ----------------------------------------------------------------------------
# Kernel 1: tiled attention -> softmax column-sums (accumulated in the output block)
# grid = (B, HW // TQ); Kcat stays resident per batch element.
# ----------------------------------------------------------------------------
def _attn_colsum_kernel(q_ref, k_ref, colsum_ref):
    iq = pl.program_id(1)

    @pl.when(iq == 0)
    def _init():
        colsum_ref[...] = jnp.zeros_like(colsum_ref)

    # Scores for this query-row tile against all keys: (TQ, HW).
    # The C^-0.5 scale is pre-folded into the query projection weights (wrapper).
    # dot_general contracts the trailing channel dim of both operands (no explicit K.T).
    s = lax.dot_general(q_ref[...], k_ref[...],
                        dimension_numbers=(((1,), (1,)), ((), ())),
                        preferred_element_type=jnp.float32)

    # Row softmax (full rows available because Kcat is resident), then column sums.
    m = jnp.max(s, axis=-1, keepdims=True)
    p = jnp.exp(s - m)
    l = jnp.sum(p, axis=-1, keepdims=True)
    colsum_ref[...] += jnp.sum(p * pl.reciprocal(l, approx=True),
                               axis=0, keepdims=True)


# ----------------------------------------------------------------------------
# Kernel 2: elementwise fusion in channel-major layout (lane-dense HW on lanes)
# grid = (B, HW // TP)
# ----------------------------------------------------------------------------
def _fuse_kernel(rgb_ref, d_ref, attn_ref, new_rgb_ref, new_d_ref, fusion_ref):
    a = attn_ref[...]                       # (C, 1) per-channel attention vector
    rgb = rgb_ref[...]                      # (C, TP)
    d = d_ref[...]
    new_rgb = rgb * (1.0 + a)               # RGB + RGB * attn
    new_d = d * (2.0 - a)                   # D   + D * (1 - attn)
    new_rgb_ref[...] = new_rgb
    new_d_ref[...] = new_d
    fusion_ref[...] = new_rgb * new_d


# ----------------------------------------------------------------------------
# Tile-size heuristics (account for BlockSpec double-buffering)
# ----------------------------------------------------------------------------
def _pick_tq(HW, C, budget=24 * 1024 * 1024):
    # Largest power-of-two query-row tile dividing HW whose working set fits a conservative
    # VMEM budget: resident Kcat bf16 (x2 buffers) + colsum output + Q tile (x2) + score slabs.
    fixed = 2 * HW * C * 2 + 2 * HW * 4
    for tq in (1024, 512, 256, 128, 64, 32, 16, 8):
        if HW % tq:
            continue
        per_tile = 2 * tq * C * 2 + 3 * tq * HW * 4
        if fixed + per_tile <= budget:
            return tq
    return HW


def _pick_tp(HW, C, budget=12 * 1024 * 1024):
    divisors = [c for c in (2048, 1024, 512, 256, 128) if HW % c == 0]
    for cand in divisors:                    # 2 inputs + 3 outputs, double-buffered, f32
        if 2 * 5 * C * cand * 4 <= budget:
            return cand
    return divisors[-1] if divisors else HW


# ----------------------------------------------------------------------------
# Wrapper (NCHW in/out, BN + scale + post-attention weight folding, pallas_call plumbing)
# ----------------------------------------------------------------------------
def fusionmodel_forward(rgb_nchw, d_nchw, params, *, tq=None, tp=None):
    B, C, H, W = rgb_nchw.shape
    HW = H * W
    eps = 1e-5
    f32 = jnp.float32

    rgb_cm = rgb_nchw.reshape(B, C, HW).astype(f32)     # channel-major, free reshape
    d_cm = d_nchw.reshape(B, C, HW).astype(f32)

    # ---- fold eval-mode BatchNorm into the query/key 1x1 convs ----
    def fold_bn(w_io, b, gamma, beta, mean, var):
        s = gamma / jnp.sqrt(var + eps)
        return w_io * s[None, :], (b - mean) * s + beta

    qw, qb = fold_bn(params['qw'], params['qb'], params['q_gamma'], params['q_beta'],
                     params['q_mean'], params['q_var'])
    kw, kb = fold_bn(params['kw'], params['kb'], params['k_gamma'], params['k_beta'],
                     params['k_mean'], params['k_var'])
    # fold the C^-0.5 similarity scale into the query projection (positive scale commutes
    # with ReLU) -> no per-element scale on the big (TQ, HW) score slab inside the kernel.
    scale = float(C) ** -0.5
    qw = qw * scale
    qb = qb * scale
    vw, vb = params['vw'], params['vb']

    # ---- Q/K/V in pixel-major, channel-concatenated form: Xcat[p] = [X(rgb)[p], X(d)[p]] ----
    def conv_pm(x_cm, w_io, b):              # (B,C,HW) x (C,Co) -> (B,HW,Co)
        return jnp.einsum('bcp,co->bpo', x_cm, w_io, precision=HIGHEST) + b[None, None, :]

    q_cat = jnp.concatenate([jax.nn.relu(conv_pm(rgb_cm, qw, qb)),
                             jax.nn.relu(conv_pm(d_cm, qw, qb))], axis=-1)
    k_cat = jnp.concatenate([jax.nn.relu(conv_pm(rgb_cm, kw, kb)),
                             jax.nn.relu(conv_pm(d_cm, kw, kb))], axis=-1)
    v_cat = jnp.concatenate([conv_pm(rgb_cm, vw, vb),
                             conv_pm(d_cm, vw, vb)], axis=-1).astype(f32)

    q_cat = q_cat.astype(jnp.bfloat16)       # MXU-native operands for the big matmul
    k_cat = k_cat.astype(jnp.bfloat16)

    # ---- fold W -> conv1 -> conv2 (identical RGB/D halves) into one (C, C) affine ----
    wc = params['c2w'][:C] + params['c2w'][C:]        # conv2 input halves are identical
    c2we, c2wo = wc[0::2], wc[1::2]                   # channel interleave of .view(B,C,H,W)
    pre = params['Ww'] @ params['c1w']                # (C//2, C//2)
    f_cat = jnp.concatenate([pre @ c2we, pre @ c2wo], axis=0).astype(f32)       # (C, C)
    f_bias = ((params['Wb'] @ params['c1w'] + params['c1b']) @ (c2we + c2wo)
              + params['c2b']).reshape(1, C).astype(f32)

    # ---- tiles ----
    if tq is None:
        tq = _pick_tq(HW, C)
    assert HW % tq == 0 and (tq % 8 == 0 or tq == HW)
    nq = HW // tq
    if tp is None:
        tp = _pick_tp(HW, C)
    assert HW % tp == 0
    n_ptiles = HW // tp

    # ---- kernel 1: softmax column sums (the only O(HW^2) work), (B, 1, HW) lane-dense ----
    colsum = pl.pallas_call(
        _attn_colsum_kernel,
        grid=(B, nq),
        in_specs=[
            pl.BlockSpec((None, tq, C), lambda b, i: (b, i, 0)),   # Qcat query-row tile
            pl.BlockSpec((None, HW, C), lambda b, i: (b, 0, 0)),   # Kcat resident
        ],
        out_specs=pl.BlockSpec((None, 1, HW), lambda b, i: (b, 0, 0)),
        out_shape=jax.ShapeDtypeStruct((B, 1, HW), f32),
        compiler_params=pltpu.CompilerParams(
            dimension_semantics=("parallel", "arbitrary"),
            vmem_limit_bytes=_VMEM_LIMIT),
    )(q_cat, k_cat)

    # GAP commutes with the per-pixel affine tail (W -> conv1 -> conv2): tiny XLA ops.
    mean_ctx = jnp.einsum('bqp,bpc->bqc', colsum, v_cat,
                          precision=HIGHEST) * (1.0 / float(HW))                # (B, 1, C)
    attn = jax.nn.sigmoid(jnp.einsum('bqc,cd->bqd', mean_ctx, f_cat,
                                     precision=HIGHEST) + f_bias[None])         # (B, 1, C)
    attn_cm = attn.transpose(0, 2, 1)        # (B, C, 1) — broadcasts over lanes in kernel 2

    # ---- kernel 2: elementwise fusion, channel-major so stores are lane-dense ----
    new_rgb, new_d, fusion = pl.pallas_call(
        _fuse_kernel,
        grid=(B, n_ptiles),
        in_specs=[
            pl.BlockSpec((None, C, tp), lambda b, j: (b, 0, j)),
            pl.BlockSpec((None, C, tp), lambda b, j: (b, 0, j)),
            pl.BlockSpec((None, C, 1), lambda b, j: (b, 0, 0)),
        ],
        out_specs=[pl.BlockSpec((None, C, tp), lambda b, j: (b, 0, j))] * 3,
        out_shape=[jax.ShapeDtypeStruct((B, C, HW), f32)] * 3,
        compiler_params=pltpu.CompilerParams(
            dimension_semantics=("parallel", "parallel"),
            vmem_limit_bytes=_VMEM_LIMIT),
    )(rgb_cm, d_cm, attn_cm)

    shape4 = (B, C, H, W)
    return new_rgb.reshape(shape4), new_d.reshape(shape4), fusion.reshape(shape4)


# ----------------------------------------------------------------------------
# Pure-JAX reference that follows the PyTorch forward literally (for checking).
# Conv weights use the (C_in, C_out) convention == torch_weight[:, :, 0, 0].T
# ----------------------------------------------------------------------------
def reference_forward(rgb, d, params):
    B, C, H, W = rgb.shape
    HW = H * W
    Ch = C // 2
    eps = 1e-5

    def conv1x1(x, w_io, b):                            # x: (B, Cin, P, 1)
        y = jnp.einsum('bcp,co->bop', x[..., 0], w_io, precision=HIGHEST)
        return (y + b[None, :, None])[..., None]

    def bn_relu(x, gamma, beta, mean, var):
        g = gamma[None, :, None, None]
        bt = beta[None, :, None, None]
        m = mean[None, :, None, None]
        v = var[None, :, None, None]
        return jnp.maximum((x - m) / jnp.sqrt(v + eps) * g + bt, 0.0)

    concat = jnp.concatenate([rgb.reshape(B, C, HW, 1), d.reshape(B, C, HW, 1)], axis=2)

    q = bn_relu(conv1x1(concat, params['qw'], params['qb']),
                params['q_gamma'], params['q_beta'], params['q_mean'], params['q_var'])
    k = bn_relu(conv1x1(concat, params['kw'], params['kb']),
                params['k_gamma'], params['k_beta'], params['k_mean'], params['k_var'])
    v = conv1x1(concat, params['vw'], params['vb'])

    query = q.reshape(B, C, -1).transpose(0, 2, 1)       # (B, HW, C)
    key_ = k.reshape(B, C, -1)                           # (B, C, HW)
    value = v.reshape(B, C, -1).transpose(0, 2, 1)       # (B, HW, C)

    sim = jnp.einsum('bqc,bck->bqk', query, key_, precision=HIGHEST) * (C ** -0.5)
    sim = jax.nn.softmax(sim, axis=-1)
    context = jnp.einsum('bqk,bkc->bqc', sim, value, precision=HIGHEST)
    context = context.transpose(0, 2, 1).reshape(B, Ch, 2 * HW, 1)
    context = conv1x1(context, params['Ww'], params['Wb'])        # (B, C, 2HW, 1)

    rgb_ctx = conv1x1(context, params['c1w'], params['c1b']).reshape(B, C, H, W)
    d_ctx = rgb_ctx
    cat_fea = jnp.concatenate([rgb_ctx, d_ctx], axis=1).reshape(B, 2 * C, HW, 1)
    cat_fea = conv1x1(cat_fea, params['c2w'], params['c2b']).reshape(B, C, H, W)

    av = jax.nn.sigmoid(jnp.mean(cat_fea, axis=(2, 3), keepdims=True))
    new_rgb = rgb + rgb * av
    new_d = d + d * (1.0 - av)
    return new_rgb, new_d, new_rgb * new_d


# ----------------------------------------------------------------------------
# Deterministic parameter initialization (shapes follow Fusionmodel.__init__)
# ----------------------------------------------------------------------------
def init_params(key, C):
    Ch = C // 2
    ks = jax.random.split(key, 24)

    def w(k, shape, fan_in):
        return jax.random.normal(k, shape, jnp.float32) / np.sqrt(fan_in)

    return {
        'qw': w(ks[0], (C, Ch), C), 'qb': 0.1 * jax.random.normal(ks[1], (Ch,), jnp.float32),
        'q_gamma': 0.5 + jax.random.uniform(ks[2], (Ch,), jnp.float32),
        'q_beta': 0.1 * jax.random.normal(ks[3], (Ch,), jnp.float32),
        'q_mean': 0.1 * jax.random.normal(ks[4], (Ch,), jnp.float32),
        'q_var': 0.5 + jax.random.uniform(ks[5], (Ch,), jnp.float32),
        'kw': w(ks[6], (C, Ch), C), 'kb': 0.1 * jax.random.normal(ks[7], (Ch,), jnp.float32),
        'k_gamma': 0.5 + jax.random.uniform(ks[8], (Ch,), jnp.float32),
        'k_beta': 0.1 * jax.random.normal(ks[9], (Ch,), jnp.float32),
        'k_mean': 0.1 * jax.random.normal(ks[10], (Ch,), jnp.float32),
        'k_var': 0.5 + jax.random.uniform(ks[11], (Ch,), jnp.float32),
        'vw': w(ks[12], (C, Ch), C), 'vb': 0.1 * jax.random.normal(ks[13], (Ch,), jnp.float32),
        'Ww': w(ks[14], (Ch, C), Ch), 'Wb': 0.1 * jax.random.normal(ks[15], (C,), jnp.float32),
        'c1w': w(ks[16], (C, Ch), C), 'c1b': 0.1 * jax.random.normal(ks[17], (Ch,), jnp.float32),
        'c2w': w(ks[18], (2 * C, C), 2 * C), 'c2b': 0.1 * jax.random.normal(ks[19], (C,), jnp.float32),
    }


if __name__ == "__main__":
    def run_case(key, B, C, H, W, tq):
        k_rgb, k_d, k_p = jax.random.split(key, 3)
        RGB = jax.random.normal(k_rgb, (B, C, H, W), jnp.float32)
        D = jax.random.normal(k_d, (B, C, H, W), jnp.float32)
        params = init_params(k_p, C)

        outs = fusionmodel_forward(RGB, D, params, tq=tq)
        jax.block_until_ready(outs)

        refs = reference_forward(RGB, D, params)
        # bf16 MXU operands + approx reciprocal -> bf16-appropriate tolerances
        for o, r in zip(outs, refs):
            np.testing.assert_allclose(np.asarray(o), np.asarray(r), rtol=2e-2, atol=2e-2)

    key = jax.random.PRNGKey(0)
    k1, k2 = jax.random.split(key)
    # primary small demo shape; tq=128 -> 2 query tiles per batch exercises the accumulator
    run_case(k1, B=2, C=4, H=16, W=16, tq=128)
    # non-square spatial + larger C: validates the .view() layout algebra beyond C=4
    run_case(k2, B=1, C=16, H=8, W=16, tq=64)

    print("KERNEL_OK")
</pallas_src>

<mosaic_0001>
module attributes {stable_mosaic.version = 11 : i64} {
  func.func @_attn_colsum_kernel(%arg0: i32, %arg1: i32, %arg2: memref<1x128x4xbf16, #tpu.memory_space<vmem>>, %arg3: memref<1x256x4xbf16, #tpu.memory_space<vmem>>, %arg4: memref<1x1x256xf32, #tpu.memory_space<vmem>>) attributes {dimension_semantics = [#tpu.dimension_semantics<parallel>, #tpu.dimension_semantics<arbitrary>], iteration_bounds = array<i64: 2, 2>, scalar_prefetch = 0 : i64, scratch_operands = 0 : i64, tpu.core_type = #tpu.core_type<tc>, window_params = [{transform_indices = @transform_0, window_bounds = array<i64: 1, 128, 4>}, {transform_indices = @transform_1, window_bounds = array<i64: 1, 256, 4>}, {transform_indices = @transform_2, window_bounds = array<i64: 1, 1, 256>}]} {
    %c0_i32 = arith.constant 0 : i32
    %0 = arith.cmpi eq, %arg1, %c0_i32 : i32
    %1 = arith.extui %0 : i1 to i32
    %c0_i32_0 = arith.constant 0 : i32
    %2 = arith.cmpi ne, %1, %c0_i32_0 : i32
    scf.if %2 {
      %cst_15 = arith.constant 0.000000e+00 : f32
      %26 = vector.broadcast %cst_15 : f32 to vector<1x256xf32>
      %c0_16 = arith.constant 0 : index
      %c0_17 = arith.constant 0 : index
      %c0_18 = arith.constant 0 : index
      %27 = vector.load %arg4[%c0_16, %c0_17, %c0_18] : memref<1x1x256xf32, #tpu.memory_space<vmem>>, vector<1x1x256xf32>
      %28 = vector.shape_cast %27 : vector<1x1x256xf32> to vector<1x256xf32>
      %29 = vector.shape_cast %26 : vector<1x256xf32> to vector<1x1x256xf32>
      tpu.vector_store %arg4[%c0_16, %c0_17, %c0_18], %29 {strides = array<i32>} : memref<1x1x256xf32, #tpu.memory_space<vmem>>, vector<1x1x256xf32>,
    } else {
    }
    %c0 = arith.constant 0 : index
    %c0_1 = arith.constant 0 : index
    %c0_2 = arith.constant 0 : index
    %3 = vector.load %arg2[%c0, %c0_1, %c0_2] : memref<1x128x4xbf16, #tpu.memory_space<vmem>>, vector<1x128x4xbf16>
    %4 = vector.shape_cast %3 : vector<1x128x4xbf16> to vector<128x4xbf16>
    %c0_3 = arith.constant 0 : index
    %c0_4 = arith.constant 0 : index
    %c0_5 = arith.constant 0 : index
    %5 = vector.load %arg3[%c0_3, %c0_4, %c0_5] : memref<1x256x4xbf16, #tpu.memory_space<vmem>>, vector<1x256x4xbf16>
    %6 = vector.shape_cast %5 : vector<1x256x4xbf16> to vector<256x4xbf16>
    %cst = arith.constant dense<0.000000e+00> : vector<128x256xf32>
    %7 = tpu.matmul %4, %6, %cst {dimension_numbers = #tpu.dot_dimension_numbers<[1], [1], [0], [0], [0, 0, 1, 0], [], []>} : vector<128x4xbf16>, vector<256x4xbf16>, vector<128x256xf32> -> vector<128x256xf32>
    %cst_6 = arith.constant dense<0xFF800000> : vector<128xf32>
    %8 = vector.multi_reduction <maximumf>, %7, %cst_6 [1] : vector<128x256xf32> to vector<128xf32>
    %9 = vector.shape_cast %8 : vector<128xf32> to vector<128x1xf32>
    %10 = vector.broadcast %9 : vector<128x1xf32> to vector<128x256xf32>
    %11 = arith.subf %7, %10 : vector<128x256xf32>
    %12 = math.exp %11 : vector<128x256xf32>
    %cst_7 = arith.constant dense<0.000000e+00> : vector<128xf32>
    %13 = vector.multi_reduction <add>, %12, %cst_7 [1] : vector<128x256xf32> to vector<128xf32>
    %14 = vector.shape_cast %13 : vector<128xf32> to vector<128x1xf32>
    %c0_8 = arith.constant 0 : index
    %c0_9 = arith.constant 0 : index
    %c0_10 = arith.constant 0 : index
    %15 = vector.load %arg4[%c0_8, %c0_9, %c0_10] : memref<1x1x256xf32, #tpu.memory_space<vmem>>, vector<1x1x256xf32>
    %16 = vector.shape_cast %15 : vector<1x1x256xf32> to vector<1x256xf32>
    %17 = tpu.reciprocal %14 {approx = true} : vector<128x1xf32> -> vector<128x1xf32>
    %18 = vector.broadcast %17 : vector<128x1xf32> to vector<128x256xf32>
    %19 = arith.mulf %12, %18 : vector<128x256xf32>
    %cst_11 = arith.constant dense<0.000000e+00> : vector<256xf32>
    %20 = vector.multi_reduction <add>, %19, %cst_11 [0] : vector<128x256xf32> to vector<256xf32>
    %21 = vector.shape_cast %20 : vector<256xf32> to vector<1x256xf32>
    %22 = arith.addf %16, %21 : vector<1x256xf32>
    %c0_12 = arith.constant 0 : index
    %c0_13 = arith.constant 0 : index
    %c0_14 = arith.constant 0 : index
    %23 = vector.load %arg4[%c0_12, %c0_13, %c0_14] : memref<1x1x256xf32, #tpu.memory_space<vmem>>, vector<1x1x256xf32>
    %24 = vector.shape_cast %23 : vector<1x1x256xf32> to vector<1x256xf32>
    %25 = vector.shape_cast %22 : vector<1x256xf32> to vector<1x1x256xf32>
    tpu.vector_store %arg4[%c0_12, %c0_13, %c0_14], %25 {strides = array<i32>} : memref<1x1x256xf32, #tpu.memory_space<vmem>>, vector<1x1x256xf32>,
    return
  }
  func.func @transform_0(%arg0: i32, %arg1: i32) -> (i32, i32, i32) {
    %c0_i32 = arith.constant 0 : i32
    %c0_i32_0 = arith.constant 0 : i32
    return %arg0, %arg1, %c0_i32 : i32, i32, i32
  }
  func.func @transform_1(%arg0: i32, %arg1: i32) -> (i32, i32, i32) {
    %c0_i32 = arith.constant 0 : i32
    %c0_i32_0 = arith.constant 0 : i32
    %c0_i32_1 = arith.constant 0 : i32
    return %arg0, %c0_i32, %c0_i32_0 : i32, i32, i32
  }
  func.func @transform_2(%arg0: i32, %arg1: i32) -> (i32, i32, i32) {
    %c0_i32 = arith.constant 0 : i32
    %c0_i32_0 = arith.constant 0 : i32
    %c0_i32_1 = arith.constant 0 : i32
    return %arg0, %c0_i32, %c0_i32_0 : i32, i32, i32
  }
}

</mosaic_0001>

<llo_original>
// kernel: tpu_custom_call.1
$region0: #{tpu_custom_call.1}
  #allocation0 [shape = 'u32[]', space=smem, size = 0x4, offset = 0x4, fixed_abs, tag = 'smem constant byte address 0x4 - core index']
  #allocation1 [shape = 'u32[144,128]{1,0:T(1,128)}', space=vmem, size = 0x12000, scoped, tag = 'internal scratch']
  %s0 = inlined_call_operand.vmem [shape: bf16[2,256,4], index: 0, kind: input, shape index: {}]
  %s1 = inlined_call_operand.vmem [shape: bf16[2,256,4], index: 1, kind: input, shape index: {}]
  %s2 = inlined_call_operand.hbm [shape: f32[2,1,256], index: 2, kind: output, shape index: {}]
  %s3 = sld [smem:[#allocation0]]
  $region45: #{tpu_custom_call.1} parent=0
    _
  %s5 = ssub.s32 1, %s3
  %s6 = scalar_select 0, %s5, %s3
  $region1: #{tpu_custom_call.1} parent=0
    #allocation2 [shape = 'u8[2048]{0}', space=vmem, size = 0x800, scoped, tag = 'output window, operand 0']
    #allocation3 [shape = 's32[2]{0}', space=sflag, size = 0x8, scoped, tag = 'scoped memory for tpu_custom_call.1']
    %7 = vsyncpa [#allocation3], 0
    %s8 = scalar_lea.sflag [#allocation3], 1
    %9 = vsyncpa %s8, 0
    loop: start=0, step=1, limit=6
    $region2: #{tpu_custom_call.1} parent=1 // loop_pre_header
      _
    $region3: #{tpu_custom_call.1} parent=1 // loop_header
      %s11 = sphi 0, %s15
      %p12 = scmp.ge.s32.totalorder %s11, 6
      %s18 = sphi 0, %s30
      %s19 = sphi 0, %s26
      %s20 = sphi 0, %s18
      %s21 = sphi 0, %s19
      %s22 = sphi 0, %s20
      %s23 = sphi 0, %s21
      %s35 = sphi 0, %s37
      %s38 = sphi 0, %s35
      %s39 = sphi 0, %s38
      %s55 = sphi 0, %s39
      %s61 = sphi 0, %s63
      %s64 = sphi 0, %s61
      %s65 = sphi 0, %s64
      %s81 = sphi 0, %s65
      %s87 = sphi 0, %s89
      %s90 = sphi 0, %s87
      %s91 = sphi 0, %s90
      %s107 = sphi 0, %s91
    $region4: #{tpu_custom_call.1} parent=1 // loop_header_branch
      %14 = sbr.rel (%p12) target = $region8
    $region5: #{tpu_custom_call.1} parent=1 // loop_body
      %s16 = ssub.s32 %s11, 1
      %s17 = ssub.s32 %s11, 2
      %s24 = sadd.s32 1, %s19
      %p25 = scmp.ge.s32.totalorder %s24, 2
      %s26 = scalar_select %p25, 0, %s24
      %s27 = sadd.s32 1, %s18
      %s28 = scalar_select %p25, %s27, %s18
      %p29 = scmp.ge.s32.totalorder %s28, 2
      %s30 = scalar_select %p29, 0, %s28
      %s31 = ssub.s32 %s18, %s30
      %s32 = ssub.s32 %s19, %s26
      %s33 = sor.u32 %s31, %s32
      %p34 = scmp.eq.s32.totalorder %s33, 0
      %s36 = sadd.s32 %s35, 1
      %s37 = scalar_select %p34, %s35, %s36
      %p40 = pneg %p34
      %p41 = scmp.eq.s32.totalorder %s11, 3
      %p42 = por %p40, %p41
      %p43 = scmp.ne.s32.totalorder %s35, %s38
      %p44 = scmp.eq.s32.totalorder %s11, 0
      %p45 = por %p43, %p44
      %p46 = scmp.ne.s32.totalorder %s35, %s38
      %p47 = scmp.eq.s32.totalorder %s16, 3
      %p48 = por %p46, %p47
      %p49 = scmp.ne.s32.totalorder %s38, %s39
      %p50 = scmp.eq.s32.totalorder %s16, 0
      %p51 = por %p49, %p50
      %p52 = scmp.ne.s32.totalorder %s38, %s39
      %p53 = scmp.eq.s32.totalorder %s17, 3
      %p54 = por %p52, %p53
      %p56 = scmp.ne.s32.totalorder %s39, %s55
      %p57 = scmp.eq.s32.totalorder %s17, 0
      %p58 = por %p56, %p57
      %s59 = ssub.s32 %s18, %s30
      %p60 = scmp.eq.s32.totalorder %s59, 0
      %s62 = sadd.s32 %s61, 1
      %s63 = scalar_select %p60, %s61, %s62
      %p66 = pneg %p60
      %p67 = scmp.eq.s32.totalorder %s11, 3
      %p68 = por %p66, %p67
      %p69 = scmp.ne.s32.totalorder %s61, %s64
      %p70 = scmp.eq.s32.totalorder %s11, 0
      %p71 = por %p69, %p70
      %p72 = scmp.ne.s32.totalorder %s61, %s64
      %p73 = scmp.eq.s32.totalorder %s16, 3
      %p74 = por %p72, %p73
      %p75 = scmp.ne.s32.totalorder %s64, %s65
      %p76 = scmp.eq.s32.totalorder %s16, 0
      %p77 = por %p75, %p76
      %p78 = scmp.ne.s32.totalorder %s64, %s65
      %p79 = scmp.eq.s32.totalorder %s17, 3
      %p80 = por %p78, %p79
      %p82 = scmp.ne.s32.totalorder %s65, %s81
      %p83 = scmp.eq.s32.totalorder %s17, 0
      %p84 = por %p82, %p83
      %s85 = ssub.s32 %s18, %s30
      %p86 = scmp.eq.s32.totalorder %s85, 0
      %s88 = sadd.s32 %s87, 1
      %s89 = scalar_select %p86, %s87, %s88
      %p92 = pneg %p86
      %p93 = scmp.eq.s32.totalorder %s11, 3
      %p94 = por %p92, %p93
      %p95 = scmp.ne.s32.totalorder %s87, %s90
      %p96 = scmp.eq.s32.totalorder %s11, 0
      %p97 = por %p95, %p96
      %p98 = scmp.ne.s32.totalorder %s87, %s90
      %p99 = scmp.eq.s32.totalorder %s16, 3
      %p100 = por %p98, %p99
      %p101 = scmp.ne.s32.totalorder %s90, %s91
      %p102 = scmp.eq.s32.totalorder %s16, 0
      %p103 = por %p101, %p102
      %p104 = scmp.ne.s32.totalorder %s90, %s91
      %p105 = scmp.eq.s32.totalorder %s17, 3
      %p106 = por %p104, %p105
      %p108 = scmp.ne.s32.totalorder %s91, %s107
      %p109 = scmp.eq.s32.totalorder %s17, 0
      %p110 = por %p108, %p109
      %p111 = scmp.le.s32.totalorder 1, %s11
      %p112 = scmp.lt.s32.totalorder %s11, 5
      %p113 = pnand %p111, %p112
      %p114 = pneg %p113
      // Predicated region
      $region9: #{tpu_custom_call.1} parent=5 // pred_check
        _
      $region10: #{tpu_custom_call.1} parent=5 // pred_check_branch
        %116 = sbr.rel (%p113) target = $region12
      $region11: #{tpu_custom_call.1} parent=5 // pred_region
        %s117 = ssub.s32 %s11, 1
      $region12: #{tpu_custom_call.1} parent=5 // pred_fallthru
        _
      %p118 = scmp.lt.s32.totalorder %s11, 4
      // Predicated region
      $region13: #{tpu_custom_call.1} parent=5 // pred_check
        %p119 = pneg %p118
      $region14: #{tpu_custom_call.1} parent=5 // pred_check_branch
        %121 = sbr.rel (%p119) target = $region16
      $region15: #{tpu_custom_call.1} parent=5 // pred_region
        // Predicated region
        $region17: #{tpu_custom_call.1} parent=15 // pred_check
          %p122 = pneg %p45
        $region18: #{tpu_custom_call.1} parent=15 // pred_check_branch
          %124 = sbr.rel (%p122) target = $region20
        $region19: #{tpu_custom_call.1} parent=15 // pred_region
          %s125 = smul.u32 16, %s19
          %p126 = scmp.lt.s32.totalorder %s18, 1
          %s127 = scalar_select %p126, %s18, 1
          %p128 = scmp.lt.s32.totalorder %s125, 31
          %s129 = scalar_select %p128, %s125, 31
          %s130 = smul.addr %s127, 32
          %s131 = sadd.s32 %s129, %s130
          %s132 = smul.addr %s131, 4
          %s133 = scalar_lea.vmem %s0, %s132
          %s134 = smul.u32 16, %s19
        $region20: #{tpu_custom_call.1} parent=15 // pred_fallthru
          _
        // Predicated region
        $region21: #{tpu_custom_call.1} parent=15 // pred_check
          %p135 = pneg %p71
        $region22: #{tpu_custom_call.1} parent=15 // pred_check_branch
          %137 = sbr.rel (%p135) target = $region24
        $region23: #{tpu_custom_call.1} parent=15 // pred_region
          %p138 = scmp.lt.s32.totalorder %s18, 1
          %s139 = scalar_select %p138, %s18, 1
          %s140 = smul.addr %s139, 32
          %s141 = smul.addr %s140, 4
          %s142 = scalar_lea.vmem %s1, %s141
        $region24: #{tpu_custom_call.1} parent=15 // pred_fallthru
          _
      $region16: #{tpu_custom_call.1} parent=5 // pred_fallthru
        _
      %p143 = scmp.le.s32.totalorder 1, %s11
      %p144 = scmp.lt.s32.totalorder %s11, 5
      %p145 = pnand %p143, %p144
      %p146 = pneg %p145
      // Predicated region
      $region25: #{tpu_custom_call.1} parent=5 // pred_check
        _
      $region26: #{tpu_custom_call.1} parent=5 // pred_check_branch
        %148 = sbr.rel (%p145) target = $region28
      $region27: #{tpu_custom_call.1} parent=5 // pred_region
        %s149 = ssub.s32 %s11, 1
        %s150 = smul.u32 16, %s21
        %p151 = scmp.lt.s32.totalorder %s20, 1
        %s152 = scalar_select %p151, %s20, 1
        %p153 = scmp.lt.s32.totalorder %s150, 31
        %s154 = scalar_select %p153, %s150, 31
        %s155 = smul.addr %s152, 32
        %s156 = sadd.s32 %s154, %s155
        %s157 = smul.addr %s156, 4
        %s158 = scalar_lea.vmem %s0, %s157
        %p159 = pneg %p51
        %p160 = pneg %p48
        %p161 = scmp.lt.s32.totalorder %s20, 1
        %s162 = scalar_select %p161, %s20, 1
        %s163 = smul.addr %s162, 32
        %s164 = smul.addr %s163, 4
        %s165 = scalar_lea.vmem %s1, %s164
        %p166 = pneg %p77
        %p167 = pneg %p74
        %p168 = pneg %p103
        %p169 = pneg %p100
        %s170 = sand.u32 %s90, 1
        %s171 = scalar_lea.sflag [#allocation3], %s170
        %s172 = sand.u32 %s90, 1
        %s173 = smul.addr %s172, 2
        %s174 = scalar_lea.vmem [#allocation2], %s173
        %s175 = smul.u32 16, %s21
        %p176 = scmp.lt.s32.totalorder %s20, 1
        %s177 = scalar_select %p176, %s20, 1
        %p178 = scmp.lt.s32.totalorder %s175, 31
        %s179 = scalar_select %p178, %s175, 31
        %s180 = smul.addr %s177, 32
        %s181 = sadd.s32 %s179, %s180
        %s182 = smul.addr %s181, 4
        %s183 = scalar_lea.vmem %s0, %s182
        %s184 = smul.u32 16, %s21
        %p185 = scmp.lt.s32.totalorder %s20, 1
        %s186 = scalar_select %p185, %s20, 1
        %s187 = smul.addr %s186, 32
        %s188 = smul.addr %s187, 4
        %s189 = scalar_lea.vmem %s1, %s188
        %p191 = scmp.eq.s32.totalorder %s21, 0
        // Predicated region
        $region29: #{tpu_custom_call.1} parent=27 // pred_check
          %p192 = pneg %p191
        $region30: #{tpu_custom_call.1} parent=27 // pred_check_branch
          %194 = sbr.rel (%p192) target = $region32
        $region31: #{tpu_custom_call.1} parent=27 // pred_region
          %v195 = vlaneseq
          %vm196 = vcmp.ge.s32.totalorder %v195, 0
          %vm197 = vcmp.lt.s32.totalorder %v195, 256
          %vm198 = vmand %vm196, %vm197
          %199 = vst.msk [vmem:[%s174] sm:$0x3] %vm198, 0.0
        $region32: #{tpu_custom_call.1} parent=27 // pred_fallthru
          _
        %v200 = vld [vmem:[%s183] sm:$0xf]
        %v201 = vld [vmem:[%s183 + $0x4] sm:$0xf]
        %v202 = vld [vmem:[%s183 + $0x8] sm:$0xf]
        %v203 = vld [vmem:[%s183 + $0xc] sm:$0xf]
        %v204 = vld [vmem:[%s183 + $0x10] sm:$0xf]
        %v205 = vld [vmem:[%s183 + $0x14] sm:$0xf]
        %v206 = vld [vmem:[%s183 + $0x18] sm:$0xf]
        %v207 = vld [vmem:[%s183 + $0x1c] sm:$0xf]
        %v208 = vld [vmem:[%s183 + $0x20] sm:$0xf]
        %v209 = vld [vmem:[%s183 + $0x24] sm:$0xf]
        %v210 = vld [vmem:[%s183 + $0x28] sm:$0xf]
        %v211 = vld [vmem:[%s183 + $0x2c] sm:$0xf]
        %v212 = vld [vmem:[%s183 + $0x30] sm:$0xf]
        %v213 = vld [vmem:[%s183 + $0x34] sm:$0xf]
        %v214 = vld [vmem:[%s183 + $0x38] sm:$0xf]
        %v215 = vld [vmem:[%s183 + $0x3c] sm:$0xf]
        %v216 = vld [vmem:[%s189] sm:$0xf]
        %v217 = vld [vmem:[%s189 + $0x4] sm:$0xf]
        %v218 = vld [vmem:[%s189 + $0x8] sm:$0xf]
        %v219 = vld [vmem:[%s189 + $0xc] sm:$0xf]
        %v220 = vld [vmem:[%s189 + $0x10] sm:$0xf]
        %v221 = vld [vmem:[%s189 + $0x14] sm:$0xf]
        %v222 = vld [vmem:[%s189 + $0x18] sm:$0xf]
        %v223 = vld [vmem:[%s189 + $0x1c] sm:$0xf]
        %v224 = vld [vmem:[%s189 + $0x20] sm:$0xf]
        %v225 = vld [vmem:[%s189 + $0x24] sm:$0xf]
        %v226 = vld [vmem:[%s189 + $0x28] sm:$0xf]
        %v227 = vld [vmem:[%s189 + $0x2c] sm:$0xf]
        %v228 = vld [vmem:[%s189 + $0x30] sm:$0xf]
        %v229 = vld [vmem:[%s189 + $0x34] sm:$0xf]
        %v230 = vld [vmem:[%s189 + $0x38] sm:$0xf]
        %v231 = vld [vmem:[%s189 + $0x3c] sm:$0xf]
        %v232 = vld [vmem:[%s189 + $0x40] sm:$0xf]
        %v233 = vld [vmem:[%s189 + $0x44] sm:$0xf]
        %v234 = vld [vmem:[%s189 + $0x48] sm:$0xf]
        %v235 = vld [vmem:[%s189 + $0x4c] sm:$0xf]
        %v236 = vld [vmem:[%s189 + $0x50] sm:$0xf]
        %v237 = vld [vmem:[%s189 + $0x54] sm:$0xf]
        %v238 = vld [vmem:[%s189 + $0x58] sm:$0xf]
        %v239 = vld [vmem:[%s189 + $0x5c] sm:$0xf]
        %v240 = vld [vmem:[%s189 + $0x60] sm:$0xf]
        %v241 = vld [vmem:[%s189 + $0x64] sm:$0xf]
        %v242 = vld [vmem:[%s189 + $0x68] sm:$0xf]
        %v243 = vld [vmem:[%s189 + $0x6c] sm:$0xf]
        %v244 = vld [vmem:[%s189 + $0x70] sm:$0xf]
        %v245 = vld [vmem:[%s189 + $0x74] sm:$0xf]
        %v246 = vld [vmem:[%s189 + $0x78] sm:$0xf]
        %v247 = vld [vmem:[%s189 + $0x7c] sm:$0xf]
        %v264 = vunpack.c.l.b16 %v200
        %v265 = vunpack.c.l.b16 %v201
        %v266 = vunpack.c.l.b16 %v202
        %v267 = vunpack.c.l.b16 %v203
        %v268 = vunpack.c.l.b16 %v204
        %v269 = vunpack.c.l.b16 %v205
        %v270 = vunpack.c.l.b16 %v206
        %v271 = vunpack.c.l.b16 %v207
        %v272 = vunpack.c.l.b16 %v208
        %v273 = vunpack.c.l.b16 %v209
        %v274 = vunpack.c.l.b16 %v210
        %v275 = vunpack.c.l.b16 %v211
        %v276 = vunpack.c.l.b16 %v212
        %v277 = vunpack.c.l.b16 %v213
        %v278 = vunpack.c.l.b16 %v214
        %v279 = vunpack.c.l.b16 %v215
        %v280 = vpack.c.b16 %v265, %v264
        %v281 = vpack.c.b16 %v267, %v266
        %v282 = vpack.c.b16 %v269, %v268
        %v283 = vpack.c.b16 %v271, %v270
        %v284 = vpack.c.b16 %v273, %v272
        %v285 = vpack.c.b16 %v275, %v274
        %v286 = vpack.c.b16 %v277, %v276
        %v287 = vpack.c.b16 %v279, %v278
        %v320 = vunpack.c.l.b16 %v216
        %v321 = vunpack.c.l.b16 %v217
        %v322 = vunpack.c.l.b16 %v218
        %v323 = vunpack.c.l.b16 %v219
        %v324 = vunpack.c.l.b16 %v220
        %v325 = vunpack.c.l.b16 %v221
        %v326 = vunpack.c.l.b16 %v222
        %v327 = vunpack.c.l.b16 %v223
        %v328 = vunpack.c.l.b16 %v224
        %v329 = vunpack.c.l.b16 %v225
        %v330 = vunpack.c.l.b16 %v226
        %v331 = vunpack.c.l.b16 %v227
        %v332 = vunpack.c.l.b16 %v228
        %v333 = vunpack.c.l.b16 %v229
        %v334 = vunpack.c.l.b16 %v230
        %v335 = vunpack.c.l.b16 %v231
        %v336 = vunpack.c.l.b16 %v232
        %v337 = vunpack.c.l.b16 %v233
        %v338 = vunpack.c.l.b16 %v234
        %v339 = vunpack.c.l.b16 %v235
        %v340 = vunpack.c.l.b16 %v236
        %v341 = vunpack.c.l.b16 %v237
        %v342 = vunpack.c.l.b16 %v238
        %v343 = vunpack.c.l.b16 %v239
        %v344 = vunpack.c.l.b16 %v240
        %v345 = vunpack.c.l.b16 %v241
        %v346 = vunpack.c.l.b16 %v242
        %v347 = vunpack.c.l.b16 %v243
        %v348 = vunpack.c.l.b16 %v244
        %v349 = vunpack.c.l.b16 %v245
        %v350 = vunpack.c.l.b16 %v246
        %v351 = vunpack.c.l.b16 %v247
        %v352 = vpack.c.b16 %v321, %v320
        %v353 = vpack.c.b16 %v323, %v322
        %v354 = vpack.c.b16 %v325, %v324
        %v355 = vpack.c.b16 %v327, %v326
        %v356 = vpack.c.b16 %v329, %v328
        %v357 = vpack.c.b16 %v331, %v330
        %v358 = vpack.c.b16 %v333, %v332
        %v359 = vpack.c.b16 %v335, %v334
        %v360 = vpack.c.b16 %v337, %v336
        %v361 = vpack.c.b16 %v339, %v338
        %v362 = vpack.c.b16 %v341, %v340
        %v363 = vpack.c.b16 %v343, %v342
        %v364 = vpack.c.b16 %v345, %v344
        %v365 = vpack.c.b16 %v347, %v346
        %v366 = vpack.c.b16 %v349, %v348
        %v367 = vpack.c.b16 %v351, %v350
        %vm368 = vcmask 31744
        %v370 = vsel %vm368, %v280, 0
        %v373 = vsel %vm368, %v281, 0
        %v376 = vsel %vm368, %v282, 0
        %v379 = vsel %vm368, %v283, 0
        %v382 = vsel %vm368, %v284, 0
        %v385 = vsel %vm368, %v285, 0
        %v388 = vsel %vm368, %v286, 0
        %v391 = vsel %vm368, %v287, 0
        %v394 = vsel %vm368, %v352, 0
        %v397 = vsel %vm368, %v353, 0
        %v400 = vsel %vm368, %v354, 0
        %v403 = vsel %vm368, %v355, 0
        %v406 = vsel %vm368, %v356, 0
        %v409 = vsel %vm368, %v357, 0
        %v412 = vsel %vm368, %v358, 0
        %v415 = vsel %vm368, %v359, 0
        %v418 = vsel %vm368, %v360, 0
        %v421 = vsel %vm368, %v361, 0
        %v424 = vsel %vm368, %v362, 0
        %v427 = vsel %vm368, %v363, 0
        %v430 = vsel %vm368, %v364, 0
        %v433 = vsel %vm368, %v365, 0
        %v436 = vsel %vm368, %v366, 0
        %v439 = vsel %vm368, %v367, 0
        %441 = vmatprep.subr.bf16.mxu0 0
        %442 = vmatpush1.bf16.xpose.msra.mxu0 %v415
        %443 = vmatprep.subr.bf16.mxu0 0
        %444 = vmatpush1.bf16.xpose.msra.mxu0 %v412
        %445 = vmatprep.subr.bf16.mxu0 0
        %446 = vmatpush1.bf16.xpose.msra.mxu0 %v409
        %447 = vmatprep.subr.bf16.mxu0 0
        %448 = vmatpush1.bf16.xpose.msra.mxu0 %v406
        %449 = vmatprep.subr.bf16.mxu0 0
        %450 = vmatpush1.bf16.xpose.msra.mxu0 %v403
        %451 = vmatprep.subr.bf16.mxu0 0
        %452 = vmatpush1.bf16.xpose.msra.mxu0 %v400
        %453 = vmatprep.subr.bf16.mxu0 0
        %454 = vmatpush1.bf16.xpose.msra.mxu0 %v397
        %455 = vmatprep.subr.bf16.mxu0 0
        %456 = vmatpush1.bf16.xpose.msra.mxu0 %v394
        %457 = vmatprep.subr.bf16.mxu0 0
        %458 = vmatpush2.bf16.xpose.msra.mxu0 %v439
        %459 = vmatprep.subr.bf16.mxu0 0
        %460 = vmatpush2.bf16.xpose.msra.mxu0 %v436
        %461 = vmatprep.subr.bf16.mxu0 0
        %462 = vmatpush2.bf16.xpose.msra.mxu0 %v433
        %463 = vmatprep.subr.bf16.mxu0 0
        %464 = vmatpush2.bf16.xpose.msra.mxu0 %v430
        %465 = vmatprep.subr.bf16.mxu0 0
        %466 = vmatpush2.bf16.xpose.msra.mxu0 %v427
        %467 = vmatprep.subr.bf16.mxu0 0
        %468 = vmatpush2.bf16.xpose.msra.mxu0 %v424
        %469 = vmatprep.subr.bf16.mxu0 0
        %470 = vmatpush2.bf16.xpose.msra.mxu0 %v421
        %471 = vmatprep.subr.bf16.mxu0 0
        %472 = vmatpush2.bf16.xpose.msra.mxu0 %v418
        %473 = vmatprep.mubr.bf16.mxu0 0
        %474 = vmatmul.mubr.bf16.gmra.mxu0 %v370
        %v475 = vpop.f32.mrf.mxu0
        %v476 = vadd.f32 0.0, %v475
        %v477 = vpop.f32.mrf.mxu0
        %v478 = vadd.f32 0.0, %v477
        %v479 = vpop.f32.mrf.mxu0
        %v480 = vadd.f32 0.0, %v479
        %v481 = vpop.f32.mrf.mxu0
        %v482 = vadd.f32 0.0, %v481
        %483 = vmatprep.mubr.bf16.mxu0 0
        %484 = vmatmul.mubr.bf16.gmra.mxu0 %v373
        %v485 = vpop.f32.mrf.mxu0
        %v486 = vadd.f32 0.0, %v485
        %v487 = vpop.f32.mrf.mxu0
        %v488 = vadd.f32 0.0, %v487
        %v489 = vpop.f32.mrf.mxu0
        %v490 = vadd.f32 0.0, %v489
        %v491 = vpop.f32.mrf.mxu0
        %v492 = vadd.f32 0.0, %v491
        %493 = vmatprep.mubr.bf16.mxu0 0
        %494 = vmatmul.mubr.bf16.gmra.mxu0 %v376
        %v495 = vpop.f32.mrf.mxu0
        %v496 = vadd.f32 0.0, %v495
        %v497 = vpop.f32.mrf.mxu0
        %v498 = vadd.f32 0.0, %v497
        %v499 = vpop.f32.mrf.mxu0
        %v500 = vadd.f32 0.0, %v499
        %v501 = vpop.f32.mrf.mxu0
        %v502 = vadd.f32 0.0, %v501
        %503 = vmatprep.mubr.bf16.mxu0 0
        %504 = vmatmul.mubr.bf16.gmra.mxu0 %v379
        %v505 = vpop.f32.mrf.mxu0
        %v506 = vadd.f32 0.0, %v505
        %v507 = vpop.f32.mrf.mxu0
        %v508 = vadd.f32 0.0, %v507
        %v509 = vpop.f32.mrf.mxu0
        %v510 = vadd.f32 0.0, %v509
        %v511 = vpop.f32.mrf.mxu0
        %v512 = vadd.f32 0.0, %v511
        %513 = vmatprep.mubr.bf16.mxu0 0
        %514 = vmatmul.mubr.bf16.gmra.mxu0 %v382
        %v515 = vpop.f32.mrf.mxu0
        %v516 = vadd.f32 0.0, %v515
        %v517 = vpop.f32.mrf.mxu0
        %v518 = vadd.f32 0.0, %v517
        %v519 = vpop.f32.mrf.mxu0
        %v520 = vadd.f32 0.0, %v519
        %v521 = vpop.f32.mrf.mxu0
        %v522 = vadd.f32 0.0, %v521
        %523 = vmatprep.mubr.bf16.mxu0 0
        %524 = vmatmul.mubr.bf16.gmra.mxu0 %v385
        %v525 = vpop.f32.mrf.mxu0
        %v526 = vadd.f32 0.0, %v525
        %v527 = vpop.f32.mrf.mxu0
        %v528 = vadd.f32 0.0, %v527
        %v529 = vpop.f32.mrf.mxu0
        %v530 = vadd.f32 0.0, %v529
        %v531 = vpop.f32.mrf.mxu0
        %v532 = vadd.f32 0.0, %v531
        %533 = vmatprep.mubr.bf16.mxu0 0
        %534 = vmatmul.mubr.bf16.gmra.mxu0 %v388
        %v535 = vpop.f32.mrf.mxu0
        %v536 = vadd.f32 0.0, %v535
        %v537 = vpop.f32.mrf.mxu0
        %v538 = vadd.f32 0.0, %v537
        %v539 = vpop.f32.mrf.mxu0
        %v540 = vadd.f32 0.0, %v539
        %v541 = vpop.f32.mrf.mxu0
        %v542 = vadd.f32 0.0, %v541
        %543 = vmatprep.mubr.bf16.mxu0 0
        %544 = vmatmul.mubr.bf16.gmra.mxu0 %v391
        %v545 = vpop.f32.mrf.mxu0
        %v546 = vadd.f32 0.0, %v545
        %v547 = vpop.f32.mrf.mxu0
        %v548 = vadd.f32 0.0, %v547
        %v549 = vpop.f32.mrf.mxu0
        %v550 = vadd.f32 0.0, %v549
        %v551 = vpop.f32.mrf.mxu0
        %v552 = vadd.f32 0.0, %v551
        %553 = vdwg.mxu0
        %v554 = vmax.f32 %v476, %v478
        %555 = vmax.xlane.f32.xlu0 %v554
        %v556 = vpop.xlane.xlu0 %555
        %v557 = vmax.f32 %v480, %v482
        %558 = vmax.xlane.f32.xlu0 %v557
        %v559 = vpop.xlane.xlu0 %558
        %v560 = vmax.f32 %v486, %v488
        %561 = vmax.xlane.f32.xlu0 %v560
        %v562 = vpop.xlane.xlu0 %561
        %v563 = vmax.f32 %v490, %v492
        %564 = vmax.xlane.f32.xlu0 %v563
        %v565 = vpop.xlane.xlu0 %564
        %v566 = vmax.f32 %v496, %v498
        %567 = vmax.xlane.f32.xlu0 %v566
        %v568 = vpop.xlane.xlu0 %567
        %v569 = vmax.f32 %v500, %v502
        %570 = vmax.xlane.f32.xlu0 %v569
        %v571 = vpop.xlane.xlu0 %570
        %v572 = vmax.f32 %v506, %v508
        %573 = vmax.xlane.f32.xlu0 %v572
        %v574 = vpop.xlane.xlu0 %573
        %v575 = vmax.f32 %v510, %v512
        %576 = vmax.xlane.f32.xlu0 %v575
        %v577 = vpop.xlane.xlu0 %576
        %v578 = vmax.f32 %v516, %v518
        %579 = vmax.xlane.f32.xlu0 %v578
        %v580 = vpop.xlane.xlu0 %579
        %v581 = vmax.f32 %v520, %v522
        %582 = vmax.xlane.f32.xlu0 %v581
        %v583 = vpop.xlane.xlu0 %582
        %v584 = vmax.f32 %v526, %v528
        %585 = vmax.xlane.f32.xlu0 %v584
        %v586 = vpop.xlane.xlu0 %585
        %v587 = vmax.f32 %v530, %v532
        %588 = vmax.xlane.f32.xlu0 %v587
        %v589 = vpop.xlane.xlu0 %588
        %v590 = vmax.f32 %v536, %v538
        %591 = vmax.xlane.f32.xlu0 %v590
        %v592 = vpop.xlane.xlu0 %591
        %v593 = vmax.f32 %v540, %v542
        %594 = vmax.xlane.f32.xlu0 %v593
        %v595 = vpop.xlane.xlu0 %594
        %v596 = vmax.f32 %v546, %v548
        %597 = vmax.xlane.f32.xlu0 %v596
        %v598 = vpop.xlane.xlu0 %597
        %v599 = vmax.f32 %v550, %v552
        %600 = vmax.xlane.f32.xlu0 %v599
        %v601 = vpop.xlane.xlu0 %600
        %v602 = vsub.f32 %v476, %v556
        %v603 = vsub.f32 %v478, %v556
        %v604 = vsub.f32 %v480, %v559
        %v605 = vsub.f32 %v482, %v559
        %v606 = vsub.f32 %v486, %v562
        %v607 = vsub.f32 %v488, %v562
        %v608 = vsub.f32 %v490, %v565
        %v609 = vsub.f32 %v492, %v565
        %v610 = vsub.f32 %v496, %v568
        %v611 = vsub.f32 %v498, %v568
        %v612 = vsub.f32 %v500, %v571
        %v613 = vsub.f32 %v502, %v571
        %v614 = vsub.f32 %v506, %v574
        %v615 = vsub.f32 %v508, %v574
        %v616 = vsub.f32 %v510, %v577
        %v617 = vsub.f32 %v512, %v577
        %v618 = vsub.f32 %v516, %v580
        %v619 = vsub.f32 %v518, %v580
        %v620 = vsub.f32 %v520, %v583
        %v621 = vsub.f32 %v522, %v583
        %v622 = vsub.f32 %v526, %v586
        %v623 = vsub.f32 %v528, %v586
        %v624 = vsub.f32 %v530, %v589
        %v625 = vsub.f32 %v532, %v589
        %v626 = vsub.f32 %v536, %v592
        %v627 = vsub.f32 %v538, %v592
        %v628 = vsub.f32 %v540, %v595
        %v629 = vsub.f32 %v542, %v595
        %v630 = vsub.f32 %v546, %v598
        %v631 = vsub.f32 %v548, %v598
        %v632 = vsub.f32 %v550, %v601
        %v633 = vsub.f32 %v552, %v601
        %v634 = vmul.f32 %v602, 1.442695
        %v635 = vpow.pop %v634
        %v636 = vmul.f32 %v603, 1.442695
        %v637 = vpow.pop %v636
        %v638 = vmul.f32 %v604, 1.442695
        %v639 = vpow.pop %v638
        %v640 = vmul.f32 %v605, 1.442695
        %v641 = vpow.pop %v640
        %v642 = vmul.f32 %v606, 1.442695
        %v643 = vpow.pop %v642
        %v644 = vmul.f32 %v607, 1.442695
        %v645 = vpow.pop %v644
        %v646 = vmul.f32 %v608, 1.442695
        %v647 = vpow.pop %v646
        %v648 = vmul.f32 %v609, 1.442695
        %v649 = vpow.pop %v648
        %v650 = vmul.f32 %v610, 1.442695
        %v651 = vpow.pop %v650
        %v652 = vmul.f32 %v611, 1.442695
        %v653 = vpow.pop %v652
        %v654 = vmul.f32 %v612, 1.442695
        %v655 = vpow.pop %v654
        %v656 = vmul.f32 %v613, 1.442695
        %v657 = vpow.pop %v656
        %v658 = vmul.f32 %v614, 1.442695
        %v659 = vpow.pop %v658
        %v660 = vmul.f32 %v615, 1.442695
        %v661 = vpow.pop %v660
        %v662 = vmul.f32 %v616, 1.442695
        %v663 = vpow.pop %v662
        %v664 = vmul.f32 %v617, 1.442695
        %v665 = vpow.pop %v664
        %v666 = vmul.f32 %v618, 1.442695
        %v667 = vpow.pop %v666
        %v668 = vmul.f32 %v619, 1.442695
        %v669 = vpow.pop %v668
        %v670 = vmul.f32 %v620, 1.442695
        %v671 = vpow.pop %v670
        %v672 = vmul.f32 %v621, 1.442695
        %v673 = vpow.pop %v672
        %v674 = vmul.f32 %v622, 1.442695
        %v675 = vpow.pop %v674
        %v676 = vmul.f32 %v623, 1.442695
        %v677 = vpow.pop %v676
        %v678 = vmul.f32 %v624, 1.442695
        %v679 = vpow.pop %v678
        %v680 = vmul.f32 %v625, 1.442695
        %v681 = vpow.pop %v680
        %v682 = vmul.f32 %v626, 1.442695
        %v683 = vpow.pop %v682
        %v684 = vmul.f32 %v627, 1.442695
        %v685 = vpow.pop %v684
        %v686 = vmul.f32 %v628, 1.442695
        %v687 = vpow.pop %v686
        %v688 = vmul.f32 %v629, 1.442695
        %v689 = vpow.pop %v688
        %v690 = vmul.f32 %v630, 1.442695
        %v691 = vpow.pop %v690
        %v692 = vmul.f32 %v631, 1.442695
        %v693 = vpow.pop %v692
        %v694 = vmul.f32 %v632, 1.442695
        %v695 = vpow.pop %v694
        %v696 = vmul.f32 %v633, 1.442695
        %v697 = vpow.pop %v696
        %v698 = vadd.f32 %v635, %v637
        %699 = vadd.xlane.f32.xlu0 %v698
        %v700 = vpop.xlane.xlu0 %699
        %v701 = vadd.f32 %v639, %v641
        %702 = vadd.xlane.f32.xlu0 %v701
        %v703 = vpop.xlane.xlu0 %702
        %v704 = vadd.f32 %v643, %v645
        %705 = vadd.xlane.f32.xlu0 %v704
        %v706 = vpop.xlane.xlu0 %705
        %v707 = vadd.f32 %v647, %v649
        %708 = vadd.xlane.f32.xlu0 %v707
        %v709 = vpop.xlane.xlu0 %708
        %v710 = vadd.f32 %v651, %v653
        %711 = vadd.xlane.f32.xlu0 %v710
        %v712 = vpop.xlane.xlu0 %711
        %v713 = vadd.f32 %v655, %v657
        %714 = vadd.xlane.f32.xlu0 %v713
        %v715 = vpop.xlane.xlu0 %714
        %v716 = vadd.f32 %v659, %v661
        %717 = vadd.xlane.f32.xlu0 %v716
        %v718 = vpop.xlane.xlu0 %717
        %v719 = vadd.f32 %v663, %v665
        %720 = vadd.xlane.f32.xlu0 %v719
        %v721 = vpop.xlane.xlu0 %720
        %v722 = vadd.f32 %v667, %v669
        %723 = vadd.xlane.f32.xlu0 %v722
        %v724 = vpop.xlane.xlu0 %723
        %v725 = vadd.f32 %v671, %v673
        %726 = vadd.xlane.f32.xlu0 %v725
        %v727 = vpop.xlane.xlu0 %726
        %v728 = vadd.f32 %v675, %v677
        %729 = vadd.xlane.f32.xlu0 %v728
        %v730 = vpop.xlane.xlu0 %729
        %v731 = vadd.f32 %v679, %v681
        %732 = vadd.xlane.f32.xlu0 %v731
        %v733 = vpop.xlane.xlu0 %732
        %v734 = vadd.f32 %v683, %v685
        %735 = vadd.xlane.f32.xlu0 %v734
        %v736 = vpop.xlane.xlu0 %735
        %v737 = vadd.f32 %v687, %v689
        %738 = vadd.xlane.f32.xlu0 %v737
        %v739 = vpop.xlane.xlu0 %738
        %v740 = vadd.f32 %v691, %v693
        %741 = vadd.xlane.f32.xlu0 %v740
        %v742 = vpop.xlane.xlu0 %741
        %v743 = vadd.f32 %v695, %v697
        %744 = vadd.xlane.f32.xlu0 %v743
        %v745 = vpop.xlane.xlu0 %744
        %v746 = vld [vmem:[%s174] sm:$0x3]
        %v747 = vrcp.pop %v700
        %v748 = vrcp.pop %v703
        %v749 = vrcp.pop %v706
        %v750 = vrcp.pop %v709
        %v751 = vrcp.pop %v712
        %v752 = vrcp.pop %v715
        %v753 = vrcp.pop %v718
        %v754 = vrcp.pop %v721
        %v755 = vrcp.pop %v724
        %v756 = vrcp.pop %v727
        %v757 = vrcp.pop %v730
        %v758 = vrcp.pop %v733
        %v759 = vrcp.pop %v736
        %v760 = vrcp.pop %v739
        %v761 = vrcp.pop %v742
        %v762 = vrcp.pop %v745
        %v763 = vmul.f32 %v635, %v747
        %v764 = vmul.f32 %v637, %v747
        %v765 = vmul.f32 %v639, %v748
        %v766 = vmul.f32 %v641, %v748
        %v767 = vmul.f32 %v643, %v749
        %v768 = vmul.f32 %v645, %v749
        %v769 = vmul.f32 %v647, %v750
        %v770 = vmul.f32 %v649, %v750
        %v771 = vmul.f32 %v651, %v751
        %v772 = vmul.f32 %v653, %v751
        %v773 = vmul.f32 %v655, %v752
        %v774 = vmul.f32 %v657, %v752
        %v775 = vmul.f32 %v659, %v753
        %v776 = vmul.f32 %v661, %v753
        %v777 = vmul.f32 %v663, %v754
        %v778 = vmul.f32 %v665, %v754
        %v779 = vmul.f32 %v667, %v755
        %v780 = vmul.f32 %v669, %v755
        %v781 = vmul.f32 %v671, %v756
        %v782 = vmul.f32 %v673, %v756
        %v783 = vmul.f32 %v675, %v757
        %v784 = vmul.f32 %v677, %v757
        %v785 = vmul.f32 %v679, %v758
        %v786 = vmul.f32 %v681, %v758
        %v787 = vmul.f32 %v683, %v759
        %v788 = vmul.f32 %v685, %v759
        %v789 = vmul.f32 %v687, %v760
        %v790 = vmul.f32 %v689, %v760
        %v791 = vmul.f32 %v691, %v761
        %v792 = vmul.f32 %v693, %v761
        %v793 = vmul.f32 %v695, %v762
        %v794 = vmul.f32 %v697, %v762
        %v795 = vadd.f32 %v763, %v765
        %v796 = vadd.f32 %v795, %v767
        %v797 = vadd.f32 %v796, %v769
        %v798 = vadd.f32 %v797, %v771
        %v799 = vadd.f32 %v798, %v773
        %v800 = vadd.f32 %v799, %v775
        %v801 = vadd.f32 %v800, %v777
        %v802 = vadd.f32 %v801, %v779
        %v803 = vadd.f32 %v802, %v781
        %v804 = vadd.f32 %v803, %v783
        %v805 = vadd.f32 %v804, %v785
        %v806 = vadd.f32 %v805, %v787
        %v807 = vadd.f32 %v806, %v789
        %v808 = vadd.f32 %v807, %v791
        %v809 = vadd.f32 %v808, %v793
        %v810 = vrot.slane %v809, 4
        %v811 = vadd.f32 %v809, %v810
        %v812 = vrot.slane %v811, 2
        %v813 = vadd.f32 %v811, %v812
        %v814 = vrot.slane %v813, 1
        %v815 = vadd.f32 %v813, %v814
        %v816 = vadd.f32 %v764, %v766
        %v817 = vadd.f32 %v816, %v768
        %v818 = vadd.f32 %v817, %v770
        %v819 = vadd.f32 %v818, %v772
        %v820 = vadd.f32 %v819, %v774
        %v821 = vadd.f32 %v820, %v776
        %v822 = vadd.f32 %v821, %v778
        %v823 = vadd.f32 %v822, %v780
        %v824 = vadd.f32 %v823, %v782
        %v825 = vadd.f32 %v824, %v784
        %v826 = vadd.f32 %v825, %v786
        %v827 = vadd.f32 %v826, %v788
        %v828 = vadd.f32 %v827, %v790
        %v829 = vadd.f32 %v828, %v792
        %v830 = vadd.f32 %v829, %v794
        %v831 = vrot.slane %v830, 4
        %v832 = vadd.f32 %v830, %v831
        %v833 = vrot.slane %v832, 2
        %v834 = vadd.f32 %v832, %v833
        %v835 = vrot.slane %v834, 1
        %v836 = vadd.f32 %v834, %v835
        %v839 = vcombine.low %v815, %v836
        %v841 = vunpack.c.l.s4 1966171168
        %v842 = vunpack.c.0.s8 %v841
        %v843 = vlaneseq
        %v844 = vshrl.u32 %v843, 7
        %v845 = vsub.s32 %v842, %v844
        %v846 = vrot.slane %v839, %v845
        %v848 = vunpack.c.l.s4 1966171168
        %v849 = vunpack.c.0.s8 %v848
        %v850 = vlaneseq
        %v851 = vshrl.u32 %v850, 7
        %v852 = vsub.s32 %v849, %v851
        %v853 = vrot.slane %v846, %v852
        %v855 = vadd.f32 %v746, %v853
        %v856 = vlaneseq
        %vm857 = vcmp.ge.s32.totalorder %v856, 0
        %vm858 = vcmp.lt.s32.totalorder %v856, 256
        %vm859 = vmand %vm857, %vm858
        %860 = vst.msk [vmem:[%s174] sm:$0x3] %vm859, %v855
        %s861 = sand.u32 %s90, 1
        %s862 = scalar_lea.sflag [#allocation3], %s861
        %s863 = sand.u32 %s90, 1
        %s864 = smul.addr %s863, 2
        %s865 = scalar_lea.vmem [#allocation2], %s864
        // Predicated region
        $region33: #{tpu_custom_call.1} parent=27 // pred_check
          %p866 = pneg %p100
        $region34: #{tpu_custom_call.1} parent=27 // pred_check_branch
          %868 = sbr.rel (%p866) target = $region36
        $region35: #{tpu_custom_call.1} parent=27 // pred_region
          %s870 = ssub.s32 32, 32
          %871 = vsyncadd %s862, %s870
          %s872 = smul.addr %s20, 2
          %s873 = smul.addr %s872, 16
          %s874 = scalar_lea.hbm %s2, %s873
          %s876 = sshll.u32 %s865, 4
          %s877 = int_to_ptr.vmem [resolvable:$true] %s876
          %879 = dma.vmem_to_hbm [thread:$0]  %s877, 32, %s874, %s862
        $region36: #{tpu_custom_call.1} parent=27 // pred_fallthru
          _
      $region28: #{tpu_custom_call.1} parent=5 // pred_fallthru
        _
      %p880 = scmp.le.s32.totalorder 2, %s11
      // Predicated region
      $region37: #{tpu_custom_call.1} parent=5 // pred_check
        %p881 = pneg %p880
      $region38: #{tpu_custom_call.1} parent=5 // pred_check_branch
        %883 = sbr.rel (%p881) target = $region40
      $region39: #{tpu_custom_call.1} parent=5 // pred_region
        %s884 = ssub.s32 %s11, 2
        // Predicated region
        $region41: #{tpu_custom_call.1} parent=39 // pred_check
          %p885 = pneg %p106
        $region42: #{tpu_custom_call.1} parent=39 // pred_check_branch
          %887 = sbr.rel (%p885) target = $region44
        $region43: #{tpu_custom_call.1} parent=39 // pred_region
          %s888 = sand.u32 %s91, 1
          %s889 = scalar_lea.sflag [#allocation3], %s888
          %s890 = sand.u32 %s91, 1
          %s891 = smul.addr %s890, 2
          %s892 = scalar_lea.vmem [#allocation2], %s891
          %893 = dma.done %s889, 32
        $region44: #{tpu_custom_call.1} parent=39 // pred_fallthru
          _
      $region40: #{tpu_custom_call.1} parent=5 // pred_fallthru
        _
    $region6: #{tpu_custom_call.1} parent=1 // loop_footer
      %s15 = sadd.s32 1, %s11
    $region7: #{tpu_custom_call.1} parent=1 // loop_footer_branch
      %10 = sbr.rel target = $region3
    $region8: #{tpu_custom_call.1} parent=1 // loop_exit
      _
    %894 = vsyncpa [#allocation3], 1
    %s895 = scalar_lea.sflag [#allocation3], 1
    %896 = vsyncpa %s895, 1

</llo_original>
